<compile_context>
chip_gen: v6e
topology: v6e:2x2x1
jax: 0.10.0
libtpu: 0.0.40
codegen_flags: <defaults>
</compile_context>

<pallas_src>
import jax
import jax.numpy as jnp
import numpy as np
from jax.experimental import pallas as pl
from jax.experimental.pallas import tpu as pltpu


_LANE = 128
# Minimum sublane (second-minor) tile granularity by element size:
# f32 -> 8 rows, bf16/f16 -> 16, int8/fp8 -> 32 (packed dtypes fill vregs
# along sublanes; smaller row counts give masked / half-empty stores).
_SUBLANE_BY_ITEMSIZE = {4: 8, 2: 16, 1: 32}

# Single whole-array block below this size (one DMA in, one DMA out).
_SINGLE_BLOCK_BYTES = 2 * 1024 * 1024
# Target per-buffer tile size for the tiled path.  With depth-2 pipelining on
# both input and output this is ~4x this many VMEM bytes (~8 MiB), safe on all
# of v5e / v6e / v7x.
_TARGET_TILE_BYTES = 2 * 1024 * 1024


def _identity_kernel(x_ref, o_ref):
    # Pure pass-through: the probe module returns its input unchanged.
    o_ref[...] = x_ref[...]


def probe_forward(x):
    """Identity forward of ProbeModule, run through a Pallas TPU copy kernel."""
    itemsize = jnp.dtype(x.dtype).itemsize
    total = int(np.prod(x.shape)) if x.ndim else 1
    total_bytes = total * itemsize

    if total == 0:
        return x  # nothing to copy

    # ---- Small inputs: one whole-array block, no tiling overhead. ----
    if total_bytes <= _SINGLE_BLOCK_BYTES:
        ndim = x.ndim
        return pl.pallas_call(
            _identity_kernel,
            out_shape=jax.ShapeDtypeStruct(x.shape, x.dtype),
            grid=(1,),
            in_specs=[pl.BlockSpec(x.shape, lambda i: (0,) * ndim)],
            out_specs=pl.BlockSpec(x.shape, lambda i: (0,) * ndim),
            input_output_aliases={0: 0},
            compiler_params=pltpu.CompilerParams(
                vmem_limit_bytes=32 * 1024 * 1024),
        )(x)

    # ---- Large inputs: lane-dense 2D slab, big tiles, parallel grid. ----
    sublane = _SUBLANE_BY_ITEMSIZE.get(itemsize, 8)

    if total % _LANE == 0:
        # Pick the widest lane-multiple column count that divides the total
        # so stores are full-width and unmasked.  No padding is materialized.
        cols = _LANE
        for c in (2048, 1024, 512, 256):
            if total % c == 0:
                cols = c
                break
    else:
        # Ragged total: keep the original minor dimension.  A block that covers
        # the full minor extent is legal even if it is not a multiple of 128
        # (stores are partially masked), and it avoids a full-tensor pad copy.
        cols = x.shape[-1]

    rows = total // cols
    slab = x.reshape(rows, cols)

    tile_rows = max(
        sublane,
        (_TARGET_TILE_BYTES // (cols * itemsize)) // sublane * sublane,
    )
    if tile_rows >= rows:
        tile_rows = rows  # full extent along rows is always a legal block dim

    grid = (pl.cdiv(rows, tile_rows),)  # partial trailing block is masked

    out_slab = pl.pallas_call(
        _identity_kernel,
        out_shape=jax.ShapeDtypeStruct((rows, cols), x.dtype),
        grid=grid,
        in_specs=[pl.BlockSpec((tile_rows, cols), lambda i: (i, 0))],
        out_specs=pl.BlockSpec((tile_rows, cols), lambda i: (i, 0)),
        input_output_aliases={0: 0},
        compiler_params=pltpu.CompilerParams(
            dimension_semantics=("parallel",),
            vmem_limit_bytes=32 * 1024 * 1024),
    )(slab)

    return out_slab.reshape(x.shape)


class ProbeModuleJAX:
    """JAX/Pallas analogue of the PyTorch ProbeModule base class."""

    def __init__(self, key: str):
        if "." in key:
            raise ValueError('`.` must not appear in key ("{}")'.format(key))
        self.key = key

    def do_probe(self, x):
        # Abstract observation hook (side effect only, no tensor output).
        raise NotImplementedError()

    def forward(self, x):
        # `x.detach()` -> stop_gradient; the probe hook itself has no tensor
        # result, so the forward output is the input, routed through the
        # Pallas identity kernel.
        self.do_probe(jax.lax.stop_gradient(x))
        return probe_forward(x)

    def __call__(self, x):
        return self.forward(x)


class _NoOpProbe(ProbeModuleJAX):
    """Concrete probe for the demo: observes and discards."""

    def do_probe(self, x):
        # TODO(synk): real probes record host-side statistics; that stateful
        # observation has no Pallas equivalent and is a no-op here.
        del x


if __name__ == "__main__":
    rng = jax.random.PRNGKey(0)
    # Small NCHW input consistent with the module's conv-style usage.
    x = jax.random.normal(rng, (2, 4, 16, 16), dtype=jnp.float32)
    # Keep a host-side reference copy: the kernel aliases (donates) the input
    # buffer, so we do not touch `x` after the call.
    x_host = np.asarray(jax.device_get(x))

    probe = _NoOpProbe("my_probe")
    y = probe(x)
    y = jax.block_until_ready(y)

    assert y.shape == x_host.shape and y.dtype == x_host.dtype
    assert np.array_equal(np.asarray(jax.device_get(y)), x_host)
    print("KERNEL_OK")
</pallas_src>

<mosaic_0001>
module attributes {stable_mosaic.version = 11 : i64} {
  func.func @_identity_kernel(%arg0: i32, %arg1: memref<2x4x16x16xf32, #tpu.memory_space<vmem>>, %arg2: memref<2x4x16x16xf32, #tpu.memory_space<vmem>>) attributes {dimension_semantics = [#tpu.dimension_semantics<arbitrary>], iteration_bounds = array<i64: 1>, scalar_prefetch = 0 : i64, scratch_operands = 0 : i64, tpu.core_type = #tpu.core_type<tc>, window_params = [{pipeline_mode = #tpu.pipeline_mode<synchronous>, transform_indices = @transform_0, window_bounds = array<i64: 2, 4, 16, 16>}, {pipeline_mode = #tpu.pipeline_mode<synchronous>, transform_indices = @transform_1, window_bounds = array<i64: 2, 4, 16, 16>}]} {
    %c0 = arith.constant 0 : index
    %c0_0 = arith.constant 0 : index
    %c0_1 = arith.constant 0 : index
    %c0_2 = arith.constant 0 : index
    %0 = vector.load %arg1[%c0, %c0_0, %c0_1, %c0_2] : memref<2x4x16x16xf32, #tpu.memory_space<vmem>>, vector<2x4x16x16xf32>
    %c0_3 = arith.constant 0 : index
    %c0_4 = arith.constant 0 : index
    %c0_5 = arith.constant 0 : index
    %c0_6 = arith.constant 0 : index
    %1 = vector.load %arg2[%c0_3, %c0_4, %c0_5, %c0_6] : memref<2x4x16x16xf32, #tpu.memory_space<vmem>>, vector<2x4x16x16xf32>
    tpu.vector_store %arg2[%c0_3, %c0_4, %c0_5, %c0_6], %0 {strides = array<i32>} : memref<2x4x16x16xf32, #tpu.memory_space<vmem>>, vector<2x4x16x16xf32>,
    return
  }
  func.func @transform_0(%arg0: i32) -> (i32, i32, i32, i32) {
    %c0_i32 = arith.constant 0 : i32
    %c0_i32_0 = arith.constant 0 : i32
    %c0_i32_1 = arith.constant 0 : i32
    %c0_i32_2 = arith.constant 0 : i32
    %c0_i32_3 = arith.constant 0 : i32
    return %c0_i32, %c0_i32_0, %c0_i32_1, %c0_i32_2 : i32, i32, i32, i32
  }
  func.func @transform_1(%arg0: i32) -> (i32, i32, i32, i32) {
    %c0_i32 = arith.constant 0 : i32
    %c0_i32_0 = arith.constant 0 : i32
    %c0_i32_1 = arith.constant 0 : i32
    %c0_i32_2 = arith.constant 0 : i32
    %c0_i32_3 = arith.constant 0 : i32
    return %c0_i32, %c0_i32_0, %c0_i32_1, %c0_i32_2 : i32, i32, i32, i32
  }
}

</mosaic_0001>

<llo_original>
// kernel: tpu_custom_call.1
$region0: #{tpu_custom_call.1}
  #allocation0 [shape = 'u32[]', space=smem, size = 0x4, offset = 0x4, fixed_abs, tag = 'smem constant byte address 0x4 - core index']
  #allocation1 [shape = 'u32[144,128]{1,0:T(1,128)}', space=vmem, size = 0x12000, scoped, tag = 'internal scratch']
  %s0 = inlined_call_operand.hbm [shape: f32[2,4,16,16], index: 0, kind: input, shape index: {}, may-alias: {0,1}]
  %s1 = inlined_call_operand.hbm [shape: f32[2,4,16,16], index: 1, kind: output, shape index: {}, may-alias: {0,1}]
  %s2 = sld [smem:[#allocation0]]
  $region18: #{tpu_custom_call.1} parent=0
    _
  %s4 = ssub.s32 1, %s2
  %s5 = scalar_select 0, %s4, %s2
  $region1: #{tpu_custom_call.1} parent=0
    #allocation2 [shape = 'u8[65536]{0}', space=vmem, size = 0x10000, scoped, tag = 'input window, operand 0, single buffered']
    #allocation3 [shape = 's32[1]{0}', space=sflag, size = 0x4, scoped, tag = 'scoped memory for tpu_custom_call.1']
    #allocation4 [shape = 's32[1]{0}', space=sflag, size = 0x4, scoped, tag = 'scoped memory for tpu_custom_call.1']
    #allocation5 [shape = 'u8[65536]{0}', space=vmem, size = 0x10000, scoped, tag = 'output window, operand 0, single buffered']
    %6 = vsyncpa [#allocation3], 0
    %7 = vsyncpa [#allocation4], 0
    // Predicated region
    $region2: #{tpu_custom_call.1} parent=1 // pred_check
      _
    $region3: #{tpu_custom_call.1} parent=1 // pred_check_branch
      %9 = sbr.rel (0) target = $region5
    $region4: #{tpu_custom_call.1} parent=1 // pred_region
      %s11 = ssub.s32 2048, 2048
      %12 = vsyncadd [#allocation3], %s11
      %s13 = sshll.u32 [#allocation2], 4
      %s14 = int_to_ptr.vmem [resolvable:$true] %s13
      %19 = dma.hbm_to_vmem [thread:$0]  %s0, 2048, %s14, [#allocation3], 128, 128, 8
    $region5: #{tpu_custom_call.1} parent=1 // pred_fallthru
      _
    // Predicated region
    $region6: #{tpu_custom_call.1} parent=1 // pred_check
      _
    $region7: #{tpu_custom_call.1} parent=1 // pred_check_branch
      %21 = sbr.rel (0) target = $region9
    $region8: #{tpu_custom_call.1} parent=1 // pred_region
      %22 = dma.done [#allocation3], 2048
    $region9: #{tpu_custom_call.1} parent=1 // pred_fallthru
      _
    %v23 = vld [vmem:[#allocation2] sm:$0xff]
    %v24 = vld [vmem:[#allocation2 + $0x8] sm:$0xff]
    %v25 = vld [vmem:[#allocation2 + $0x10] sm:$0xff]
    %v26 = vld [vmem:[#allocation2 + $0x18] sm:$0xff]
    %v27 = vld [vmem:[#allocation2 + $0x20] sm:$0xff]
    %v28 = vld [vmem:[#allocation2 + $0x28] sm:$0xff]
    %v29 = vld [vmem:[#allocation2 + $0x30] sm:$0xff]
    %v30 = vld [vmem:[#allocation2 + $0x38] sm:$0xff]
    %v31 = vld [vmem:[#allocation2 + $0x40] sm:$0xff]
    %v32 = vld [vmem:[#allocation2 + $0x48] sm:$0xff]
    %v33 = vld [vmem:[#allocation2 + $0x50] sm:$0xff]
    %v34 = vld [vmem:[#allocation2 + $0x58] sm:$0xff]
    %v35 = vld [vmem:[#allocation2 + $0x60] sm:$0xff]
    %v36 = vld [vmem:[#allocation2 + $0x68] sm:$0xff]
    %v37 = vld [vmem:[#allocation2 + $0x70] sm:$0xff]
    %v38 = vld [vmem:[#allocation2 + $0x78] sm:$0xff]
    %vm39 = vcmask 130048
    %40 = vst.msk [vmem:[#allocation5] sm:$0xff] %vm39, %v23
    %41 = vst.msk [vmem:[#allocation5 + $0x8] sm:$0xff] %vm39, %v24
    %42 = vst.msk [vmem:[#allocation5 + $0x10] sm:$0xff] %vm39, %v25
    %43 = vst.msk [vmem:[#allocation5 + $0x18] sm:$0xff] %vm39, %v26
    %44 = vst.msk [vmem:[#allocation5 + $0x20] sm:$0xff] %vm39, %v27
    %45 = vst.msk [vmem:[#allocation5 + $0x28] sm:$0xff] %vm39, %v28
    %46 = vst.msk [vmem:[#allocation5 + $0x30] sm:$0xff] %vm39, %v29
    %47 = vst.msk [vmem:[#allocation5 + $0x38] sm:$0xff] %vm39, %v30
    %48 = vst.msk [vmem:[#allocation5 + $0x40] sm:$0xff] %vm39, %v31
    %49 = vst.msk [vmem:[#allocation5 + $0x48] sm:$0xff] %vm39, %v32
    %50 = vst.msk [vmem:[#allocation5 + $0x50] sm:$0xff] %vm39, %v33
    %51 = vst.msk [vmem:[#allocation5 + $0x58] sm:$0xff] %vm39, %v34
    %52 = vst.msk [vmem:[#allocation5 + $0x60] sm:$0xff] %vm39, %v35
    %53 = vst.msk [vmem:[#allocation5 + $0x68] sm:$0xff] %vm39, %v36
    %54 = vst.msk [vmem:[#allocation5 + $0x70] sm:$0xff] %vm39, %v37
    %55 = vst.msk [vmem:[#allocation5 + $0x78] sm:$0xff] %vm39, %v38
    // Predicated region
    $region10: #{tpu_custom_call.1} parent=1 // pred_check
      _
    $region11: #{tpu_custom_call.1} parent=1 // pred_check_branch
      %57 = sbr.rel (0) target = $region13
    $region12: #{tpu_custom_call.1} parent=1 // pred_region
      %s59 = ssub.s32 2048, 2048
      %60 = vsyncadd [#allocation4], %s59
      %s61 = sshll.u32 [#allocation5], 4
      %s62 = int_to_ptr.vmem [resolvable:$true] %s61
      %67 = dma.vmem_to_hbm [thread:$0]  %s62, 2048, %s1, [#allocation4], 128, 128, 8
    $region13: #{tpu_custom_call.1} parent=1 // pred_fallthru
      _
    // Predicated region
    $region14: #{tpu_custom_call.1} parent=1 // pred_check
      _
    $region15: #{tpu_custom_call.1} parent=1 // pred_check_branch
      %69 = sbr.rel (0) target = $region17
    $region16: #{tpu_custom_call.1} parent=1 // pred_region
      %70 = dma.done [#allocation4], 2048
    $region17: #{tpu_custom_call.1} parent=1 // pred_fallthru
      _
    %71 = vsyncpa [#allocation3], 1
    %72 = vsyncpa [#allocation4], 1

</llo_original>
